<compile_context>
chip_gen: v5e
topology: v5e:2x2
jax: 0.10.0
libtpu: 0.0.40
codegen_flags: <defaults>
</compile_context>

<pallas_src>
import jax
import jax.numpy as jnp
from jax.experimental import pallas as pl
from jax.experimental.pallas import tpu as pltpu


def _prelu_kernel(x_ref, w_ref, o_ref):
    x = x_ref[...]                      # (tm, tn) tile
    w = w_ref[...]                      # (tm, 1) per-row (== per-channel) slope
    # PReLU: where(x > 0, x, w * x)  (matches PyTorch semantics, incl. x == 0)
    o_ref[...] = jnp.where(x > 0, x, w * x)


def _round_up(a, b):
    return (a + b - 1) // b * b


def prelu_pallas(x, weight):
    """x: (N, C, H, W), weight: (C,)  ->  (N, C, H, W)"""
    N, C, H, W = x.shape
    assert weight.shape == (C,), "PReLU weight must have one slope per channel"
    NC, HW = N * C, H * W
    itemsize = jnp.dtype(x.dtype).itemsize

    # Lane tile: large multiple of 128, capped so one tile stays <= ~2 MiB.
    tn = min(_round_up(HW, 128), 2048)
    # Row tile: multiple of 8 in [8, 1024], sized so tm*tn*itemsize <= ~2 MiB.
    max_tile_bytes = 2 * 1024 * 1024
    tm = max(8, min(1024, (max_tile_bytes // (tn * itemsize)) // 8 * 8))
    tm = min(tm, _round_up(NC, 8))

    NC_p = _round_up(NC, tm)
    HW_p = _round_up(HW, tn)

    x2 = x.reshape(NC, HW)
    w_rows = jnp.broadcast_to(weight[None, :], (N, C)).reshape(NC, 1)

    # Pad so tiles divide evenly and stores are unmasked / lane-dense.
    if (NC_p, HW_p) != (NC, HW):
        x2 = jnp.pad(x2, ((0, NC_p - NC), (0, HW_p - HW)))
        w_rows = jnp.pad(w_rows, ((0, NC_p - NC), (0, 0)))

    grid = (NC_p // tm, HW_p // tn)   # rows outer (parallel), lanes inner

    slab_bytes = NC_p * HW_p * itemsize
    cost = pl.CostEstimate(
        flops=2 * NC_p * HW_p,
        transcendentals=0,
        bytes_accessed=2 * slab_bytes + NC_p * itemsize,
    )

    out2 = pl.pallas_call(
        _prelu_kernel,
        out_shape=jax.ShapeDtypeStruct((NC_p, HW_p), x.dtype),
        grid_spec=pltpu.PrefetchScalarGridSpec(
            num_scalar_prefetch=0,
            grid=grid,
            in_specs=[
                pl.BlockSpec((tm, tn), lambda i, j: (i, j)),
                pl.BlockSpec((tm, 1), lambda i, j: (i, 0)),
            ],
            out_specs=pl.BlockSpec((tm, tn), lambda i, j: (i, j)),
        ),
        compiler_params=pltpu.CompilerParams(
            dimension_semantics=("parallel", "arbitrary"),
            vmem_limit_bytes=32 * 1024 * 1024,
        ),
        cost_estimate=cost,
    )(x2, w_rows)

    if (NC_p, HW_p) != (NC, HW):
        out2 = out2[:NC, :HW]
    return out2.reshape(N, C, H, W)


if __name__ == "__main__":
    key = jax.random.PRNGKey(0)
    kx, kw = jax.random.split(key)

    # num_params = 3  =>  channel dim must be 3 for F.prelu broadcasting.
    N, C, H, W = 2, 3, 16, 16
    x = jax.random.normal(kx, (N, C, H, W), dtype=jnp.float32)

    # The PyTorch module draws torch.rand(num_params) each forward; here we
    # initialize the equivalent weights deterministically (uniform [0, 1)).
    weight = jax.random.uniform(kw, (C,), dtype=jnp.float32)

    out = prelu_pallas(x, weight)
    out = jax.block_until_ready(out)

    # reference check (plain JAX)
    ref = jnp.where(x > 0, x, weight[None, :, None, None] * x)
    assert out.shape == (N, C, H, W)
    assert out.dtype == jnp.float32
    assert jnp.allclose(out, ref, atol=1e-6, rtol=1e-6)

    print("KERNEL_OK")
</pallas_src>

<mosaic_0001>
module attributes {stable_mosaic.version = 11 : i64} {
  func.func @_prelu_kernel(%arg0: i32, %arg1: i32, %arg2: memref<8x256xf32, #tpu.memory_space<vmem>>, %arg3: memref<8x1xf32, #tpu.memory_space<vmem>>, %arg4: memref<8x256xf32, #tpu.memory_space<vmem>>) attributes {dimension_semantics = [#tpu.dimension_semantics<parallel>, #tpu.dimension_semantics<arbitrary>], iteration_bounds = array<i64: 1, 1>, scalar_prefetch = 0 : i64, scratch_operands = 0 : i64, tpu.core_type = #tpu.core_type<tc>, window_params = [{transform_indices = @transform_0, window_bounds = array<i64: 8, 256>}, {transform_indices = @transform_1, window_bounds = array<i64: 8, 1>}, {transform_indices = @transform_2, window_bounds = array<i64: 8, 256>}]} {
    %c0 = arith.constant 0 : index
    %c0_0 = arith.constant 0 : index
    %0 = vector.load %arg2[%c0, %c0_0] : memref<8x256xf32, #tpu.memory_space<vmem>>, vector<8x256xf32>
    %c0_1 = arith.constant 0 : index
    %c0_2 = arith.constant 0 : index
    %1 = vector.load %arg3[%c0_1, %c0_2] : memref<8x1xf32, #tpu.memory_space<vmem>>, vector<8x1xf32>
    %cst = arith.constant 0.000000e+00 : f32
    %2 = vector.broadcast %cst : f32 to vector<8x256xf32>
    %3 = arith.cmpf ogt, %0, %2 : vector<8x256xf32>
    %4 = vector.broadcast %1 : vector<8x1xf32> to vector<8x256xf32>
    %5 = arith.mulf %4, %0 : vector<8x256xf32>
    %6 = arith.select %3, %0, %5 : vector<8x256xi1>, vector<8x256xf32>
    %c0_3 = arith.constant 0 : index
    %c0_4 = arith.constant 0 : index
    %7 = vector.load %arg4[%c0_3, %c0_4] : memref<8x256xf32, #tpu.memory_space<vmem>>, vector<8x256xf32>
    tpu.vector_store %arg4[%c0_3, %c0_4], %6 {strides = array<i32>} : memref<8x256xf32, #tpu.memory_space<vmem>>, vector<8x256xf32>,
    return
  }
  func.func @transform_0(%arg0: i32, %arg1: i32) -> (i32, i32) {
    %c0_i32 = arith.constant 0 : i32
    return %arg0, %arg1 : i32, i32
  }
  func.func @transform_1(%arg0: i32, %arg1: i32) -> (i32, i32) {
    %c0_i32 = arith.constant 0 : i32
    %c0_i32_0 = arith.constant 0 : i32
    return %arg0, %c0_i32 : i32, i32
  }
  func.func @transform_2(%arg0: i32, %arg1: i32) -> (i32, i32) {
    %c0_i32 = arith.constant 0 : i32
    return %arg0, %arg1 : i32, i32
  }
}

</mosaic_0001>

<llo_original>
// kernel: tpu_custom_call.1
$region0: #{tpu_custom_call.1}
  #allocation0 [shape = 'u32[]', space=smem, size = 0x4, offset = 0x4, fixed_abs, tag = 'smem constant byte address 0x4 - core index']
  #allocation1 [shape = 'u32[72,128]{1,0:T(1,128)}', space=vmem, size = 0x9000, scoped, tag = 'internal scratch']
  %s0 = inlined_call_operand.hbm [shape: f32[8,256], index: 0, kind: input, shape index: {}]
  %s1 = inlined_call_operand.vmem [shape: f32[8,1], index: 1, kind: input, shape index: {}]
  %s2 = inlined_call_operand.hbm [shape: f32[8,256], index: 2, kind: output, shape index: {}]
  %s3 = sld [smem:[#allocation0]]
  $region22: #{tpu_custom_call.1} parent=0
    _
  %s5 = ssub.s32 1, %s3
  %s6 = scalar_select 0, %s5, %s3
  $region1: #{tpu_custom_call.1} parent=0
    #allocation2 [shape = 'u8[8192]{0}', space=vmem, size = 0x2000, scoped, tag = 'input window, operand 0, single buffered']
    #allocation3 [shape = 's32[1]{0}', space=sflag, size = 0x4, scoped, tag = 'scoped memory for tpu_custom_call.1']
    #allocation4 [shape = 's32[1]{0}', space=sflag, size = 0x4, scoped, tag = 'scoped memory for tpu_custom_call.1']
    #allocation5 [shape = 'u8[8192]{0}', space=vmem, size = 0x2000, scoped, tag = 'output window, operand 0, single buffered']
    %7 = vsyncpa [#allocation3], 0
    %8 = vsyncpa [#allocation4], 0
    // Predicated region
    $region2: #{tpu_custom_call.1} parent=1 // pred_check
      _
    $region3: #{tpu_custom_call.1} parent=1 // pred_check_branch
      %10 = sbr.rel (0) target = $region5
    $region4: #{tpu_custom_call.1} parent=1 // pred_region
      %12 = vsyncadd [#allocation3], 0
      %s14 = sshll.u32 %s0, 4
      %s15 = int_to_ptr.hbm [resolvable:$true] %s14
      %s16 = sshll.u32 [#allocation2], 4
      %s17 = int_to_ptr.vmem [resolvable:$true] %s16
      %19 = dma.hbm_to_vmem [thread:$0]  %s15, 256, %s17, [#allocation3]
    $region5: #{tpu_custom_call.1} parent=1 // pred_fallthru
      _
    // Predicated region
    $region6: #{tpu_custom_call.1} parent=1 // pred_check
      _
    $region7: #{tpu_custom_call.1} parent=1 // pred_check_branch
      %21 = sbr.rel (0) target = $region9
    $region8: #{tpu_custom_call.1} parent=1 // pred_region
      _
    $region9: #{tpu_custom_call.1} parent=1 // pred_fallthru
      _
    // Predicated region
    $region10: #{tpu_custom_call.1} parent=1 // pred_check
      _
    $region11: #{tpu_custom_call.1} parent=1 // pred_check_branch
      %23 = sbr.rel (0) target = $region13
    $region12: #{tpu_custom_call.1} parent=1 // pred_region
      %25 = dma.done [#allocation3], 256
    $region13: #{tpu_custom_call.1} parent=1 // pred_fallthru
      _
    %v26 = vld [vmem:[#allocation2] sm:$0xff]
    %v27 = vld [vmem:[#allocation2 + $0x8] sm:$0xff]
    %v28 = vld [vmem:[%s1] sm:$0xff]
    %vm29 = vcmp.gt.f32.partialorder %v26, 0.0
    %vm30 = vcmp.gt.f32.partialorder %v27, 0.0
    %32 = vset.pattern.permute.xlu0 0
    %33 = vperm.xlu0 %32, %v28
    %v34 = vpop.permute.xlu0 %33
    %v36 = vmul.f32 %v34, %v26
    %v37 = vmul.f32 %v34, %v27
    %v38 = vsel %vm29, %v26, %v36
    %v39 = vsel %vm30, %v27, %v37
    %40 = vst [vmem:[#allocation5] sm:$0xff] %v38
    %41 = vst [vmem:[#allocation5 + $0x8] sm:$0xff] %v39
    // Predicated region
    $region14: #{tpu_custom_call.1} parent=1 // pred_check
      _
    $region15: #{tpu_custom_call.1} parent=1 // pred_check_branch
      %43 = sbr.rel (0) target = $region17
    $region16: #{tpu_custom_call.1} parent=1 // pred_region
      %45 = vsyncadd [#allocation4], 0
      %s47 = sshll.u32 [#allocation5], 4
      %s48 = int_to_ptr.vmem [resolvable:$true] %s47
      %s49 = sshll.u32 %s2, 4
      %s50 = int_to_ptr.hbm [resolvable:$true] %s49
      %52 = dma.vmem_to_hbm [thread:$0]  %s48, 256, %s50, [#allocation4]
    $region17: #{tpu_custom_call.1} parent=1 // pred_fallthru
      _
    // Predicated region
    $region18: #{tpu_custom_call.1} parent=1 // pred_check
      _
    $region19: #{tpu_custom_call.1} parent=1 // pred_check_branch
      %54 = sbr.rel (0) target = $region21
    $region20: #{tpu_custom_call.1} parent=1 // pred_region
      %56 = dma.done [#allocation4], 256
    $region21: #{tpu_custom_call.1} parent=1 // pred_fallthru
      _
    %57 = vsyncpa [#allocation3], 1
    %58 = vsyncpa [#allocation4], 1

</llo_original>
